<compile_context>
chip_gen: v5e
topology: v5e:2x2
jax: 0.10.0
libtpu: 0.0.40
codegen_flags: <defaults>
</compile_context>

<pallas_src>
import jax
import jax.numpy as jnp
from jax.experimental import pallas as pl
from jax.experimental.pallas import tpu as pltpu

HIDDEN = 128        # per-branch hidden width
FEATURES = 4        # CartPole-like state size
OUT_ROWS = 8        # sublane-dense output slab: rows 0,1 = probs, row 2 = value


def a2c_kernel(x_ref, w1_ref, b1_ref, w2_ref, b2_ref, msig_ref, mval_ref, out_ref):
    """One batch tile of the fused actor+critic forward (feature-major).

    x_ref   : (4,   tb)  f32 states, feature-major (lane-dense batch axis)
    w1_ref  : (256, 4)   [w1_actor ; w1_critic] transposed
    b1_ref  : (256, 1)
    w2_ref  : (8,   256) fused transposed heads (see fuse_params)
    b2_ref  : (8,   1)
    msig_ref: (8,   1)   1.0 on rows 0,1 else 0.0
    mval_ref: (8,   1)   1.0 on row 2     else 0.0
    out_ref : (8,   tb)  rows 0,1 = actor probs, row 2 = critic value, rest 0
    """
    x = x_ref[...]

    # Fused layer 1 for both branches: one MXU pass, (256,4) @ (4,tb).
    h = jnp.dot(w1_ref[...], x, preferred_element_type=jnp.float32) + b1_ref[...]
    h = jnp.maximum(h, 0.0)                                       # (256, tb)

    # Fused heads: (8,256) @ (256,tb) -> lane/sublane-dense (8, tb) slab.
    #   row 0 = l0 - l1, row 1 = l1 - l0 (actor), row 2 = value (critic).
    pre = jnp.dot(w2_ref[...], h, preferred_element_type=jnp.float32) + b2_ref[...]

    # 2-class softmax == sigmoid of the logit differences.  tanh form rides
    # the EUP slot with full f32 accuracy (no VALU f32 divide, no XLU
    # reductions over a 2-wide axis).  NOTE: p0 and p1 are computed
    # independently, so p0+p1 may differ from 1.0 by ~1 ULP.
    sig = 0.5 * jnp.tanh(0.5 * pre) + 0.5                         # (8, tb)

    # Row-select via resident sublane masks (no iota / nested jnp.where).
    out_ref[...] = sig * msig_ref[...] + pre * mval_ref[...]


def fuse_params(params):
    """Pack the 8 per-layer tensors into 6 fused, transposed kernel inputs."""
    w1a, b1a, w2a, b2a, w1c, b1c, w2c, b2c = params

    # Layer 1, feature-major: h_T = w1_T @ x_T.
    w1_T = jnp.concatenate([w1a, w1c], axis=1).T                  # (256, 4)
    b1_T = jnp.concatenate([b1a, b1c], axis=1).T                  # (256, 1)

    # Fused transposed heads: (8, 256), block-structured.
    w2_T = jnp.zeros((OUT_ROWS, 2 * HIDDEN), jnp.float32)
    w2_T = w2_T.at[0, :HIDDEN].set(w2a[:, 0] - w2a[:, 1])         # -> l0 - l1
    w2_T = w2_T.at[1, :HIDDEN].set(w2a[:, 1] - w2a[:, 0])         # -> l1 - l0
    w2_T = w2_T.at[2, HIDDEN:].set(w2c[:, 0])                     # -> value

    b2_T = jnp.zeros((OUT_ROWS, 1), jnp.float32)
    b2_T = b2_T.at[0, 0].set(b2a[0, 0] - b2a[0, 1])
    b2_T = b2_T.at[1, 0].set(b2a[0, 1] - b2a[0, 0])
    b2_T = b2_T.at[2, 0].set(b2c[0, 0])

    # Sublane masks for the epilogue row-select.
    m_sig = jnp.zeros((OUT_ROWS, 1), jnp.float32).at[0:2, 0].set(1.0)
    m_val = jnp.zeros((OUT_ROWS, 1), jnp.float32).at[2, 0].set(1.0)
    return w1_T, b1_T, w2_T, b2_T, m_sig, m_val


def _round_up(n, m):
    return ((n + m - 1) // m) * m


def a2c_forward(x, fused_params, *, block_b=2048):
    """x: (B, 4) float32.  Returns (probs (B, 2), values (B, 1))."""
    w1_T, b1_T, w2_T, b2_T, m_sig, m_val = fused_params
    B, F = x.shape

    # Batch tile: multiple of 128 lanes (satisfies the (8,128) rule for any
    # caller-supplied block_b); always >= 2 grid steps so v7x's two
    # TensorCores split the batch under "parallel" semantics.
    block_b = max(128, (block_b // 128) * 128)
    tb = min(block_b, max(128, _round_up(pl.cdiv(B, 2), 128)))
    n_steps = max(2, pl.cdiv(B, tb))
    b_pad = n_steps * tb

    # Feature-major, lane-dense input slab (4, b_pad).
    x_T = x.T
    if b_pad != B:
        x_T = jnp.pad(x_T, ((0, 0), (0, b_pad - B)))

    out_slab = pl.pallas_call(
        a2c_kernel,
        out_shape=jax.ShapeDtypeStruct((OUT_ROWS, b_pad), jnp.float32),
        grid=(n_steps,),
        in_specs=[
            pl.BlockSpec((F, tb), lambda i: (0, i)),              # x: batch-tiled
            pl.BlockSpec(w1_T.shape, lambda i: (0, 0)),           # weights resident
            pl.BlockSpec(b1_T.shape, lambda i: (0, 0)),
            pl.BlockSpec(w2_T.shape, lambda i: (0, 0)),
            pl.BlockSpec(b2_T.shape, lambda i: (0, 0)),
            pl.BlockSpec(m_sig.shape, lambda i: (0, 0)),
            pl.BlockSpec(m_val.shape, lambda i: (0, 0)),
        ],
        out_specs=pl.BlockSpec((OUT_ROWS, tb), lambda i: (0, i)),
        compiler_params=pltpu.CompilerParams(
            dimension_semantics=("parallel",)),                   # v7x: 2 TCs split batch
    )(x_T, w1_T, b1_T, w2_T, b2_T, m_sig, m_val)

    # Contiguous row slices of the tiny (8, B) slab are near-free.
    probs = out_slab[0:2, :B].T                                   # (B, 2)
    values = out_slab[2:3, :B].T                                  # (B, 1)
    return probs, values


def init_params(key):
    """Deterministic init matching PyTorch Linear default (U(-1/sqrt(fan_in), +))."""
    ks = jax.random.split(key, 8)

    def linear(kw, kb, fan_in, fan_out):
        bound = 1.0 / jnp.sqrt(fan_in)
        # stored as (in, out) so the math is y = x @ W + b
        w = jax.random.uniform(kw, (fan_in, fan_out), jnp.float32, -bound, bound)
        b = jax.random.uniform(kb, (1, fan_out), jnp.float32, -bound, bound)
        return w, b

    w1a, b1a = linear(ks[0], ks[1], 4, 128)    # actor.affine1
    w2a, b2a = linear(ks[2], ks[3], 128, 2)    # actor.action_head
    w1c, b1c = linear(ks[4], ks[5], 4, 128)    # critic.affine1
    w2c, b2c = linear(ks[6], ks[7], 128, 1)    # critic.value_head
    return (w1a, b1a, w2a, b2a, w1c, b1c, w2c, b2c)


if __name__ == "__main__":
    key = jax.random.PRNGKey(0)
    k_params, k_x = jax.random.split(key)

    params = init_params(k_params)
    fused = fuse_params(params)

    B = 8
    x = jax.random.normal(k_x, (B, 4), jnp.float32)   # CartPole-like states

    probs, values = a2c_forward(x, fused)
    jax.block_until_ready((probs, values))

    # pure-JAX reference (unfused, torch-equivalent)
    w1a, b1a, w2a, b2a, w1c, b1c, w2c, b2c = params
    ha = jnp.maximum(x @ w1a + b1a, 0.0)
    ref_probs = jax.nn.softmax(ha @ w2a + b2a, axis=-1)
    hc = jnp.maximum(x @ w1c + b1c, 0.0)
    ref_values = hc @ w2c + b2c

    assert probs.shape == (B, 2) and values.shape == (B, 1)
    assert jnp.allclose(probs, ref_probs, atol=1e-4)
    assert jnp.allclose(values, ref_values, atol=1e-4)
    assert jnp.allclose(probs.sum(-1), 1.0, atol=1e-4)

    print("KERNEL_OK")
</pallas_src>

<mosaic_0001>
module attributes {stable_mosaic.version = 11 : i64} {
  func.func @a2c_kernel(%arg0: i32, %arg1: memref<4x128xf32, #tpu.memory_space<vmem>>, %arg2: memref<256x4xf32, #tpu.memory_space<vmem>>, %arg3: memref<256x1xf32, #tpu.memory_space<vmem>>, %arg4: memref<8x256xf32, #tpu.memory_space<vmem>>, %arg5: memref<8x1xf32, #tpu.memory_space<vmem>>, %arg6: memref<8x1xf32, #tpu.memory_space<vmem>>, %arg7: memref<8x1xf32, #tpu.memory_space<vmem>>, %arg8: memref<8x128xf32, #tpu.memory_space<vmem>>) attributes {dimension_semantics = [#tpu.dimension_semantics<parallel>], iteration_bounds = array<i64: 2>, scalar_prefetch = 0 : i64, scratch_operands = 0 : i64, tpu.core_type = #tpu.core_type<tc>, window_params = [{transform_indices = @transform_0, window_bounds = array<i64: 4, 128>}, {pipeline_mode = #tpu.pipeline_mode<synchronous>, transform_indices = @transform_1, window_bounds = array<i64: 256, 4>}, {pipeline_mode = #tpu.pipeline_mode<synchronous>, transform_indices = @transform_2, window_bounds = array<i64: 256, 1>}, {pipeline_mode = #tpu.pipeline_mode<synchronous>, transform_indices = @transform_3, window_bounds = array<i64: 8, 256>}, {pipeline_mode = #tpu.pipeline_mode<synchronous>, transform_indices = @transform_4, window_bounds = array<i64: 8, 1>}, {pipeline_mode = #tpu.pipeline_mode<synchronous>, transform_indices = @transform_5, window_bounds = array<i64: 8, 1>}, {pipeline_mode = #tpu.pipeline_mode<synchronous>, transform_indices = @transform_6, window_bounds = array<i64: 8, 1>}, {transform_indices = @transform_7, window_bounds = array<i64: 8, 128>}]} {
    %c0 = arith.constant 0 : index
    %c0_0 = arith.constant 0 : index
    %0 = vector.load %arg1[%c0, %c0_0] : memref<4x128xf32, #tpu.memory_space<vmem>>, vector<4x128xf32>
    %c0_1 = arith.constant 0 : index
    %c0_2 = arith.constant 0 : index
    %1 = vector.load %arg2[%c0_1, %c0_2] : memref<256x4xf32, #tpu.memory_space<vmem>>, vector<256x4xf32>
    %cst = arith.constant dense<0.000000e+00> : vector<256x128xf32>
    %2 = tpu.matmul %1, %0, %cst {dimension_numbers = #tpu.dot_dimension_numbers<[1], [0], [0], [1], [0, 0, 1, 1], [], []>} : vector<256x4xf32>, vector<4x128xf32>, vector<256x128xf32> -> vector<256x128xf32>
    %c0_3 = arith.constant 0 : index
    %c0_4 = arith.constant 0 : index
    %3 = vector.load %arg3[%c0_3, %c0_4] : memref<256x1xf32, #tpu.memory_space<vmem>>, vector<256x1xf32>
    %4 = vector.broadcast %3 : vector<256x1xf32> to vector<256x128xf32>
    %5 = arith.addf %2, %4 : vector<256x128xf32>
    %cst_5 = arith.constant 0.000000e+00 : f32
    %6 = vector.broadcast %cst_5 : f32 to vector<256x128xf32>
    %7 = arith.maximumf %5, %6 : vector<256x128xf32>
    %c0_6 = arith.constant 0 : index
    %c0_7 = arith.constant 0 : index
    %8 = vector.load %arg4[%c0_6, %c0_7] : memref<8x256xf32, #tpu.memory_space<vmem>>, vector<8x256xf32>
    %cst_8 = arith.constant dense<0.000000e+00> : vector<8x128xf32>
    %9 = tpu.matmul %8, %7, %cst_8 {dimension_numbers = #tpu.dot_dimension_numbers<[1], [0], [0], [1], [0, 0, 1, 1], [], []>} : vector<8x256xf32>, vector<256x128xf32>, vector<8x128xf32> -> vector<8x128xf32>
    %c0_9 = arith.constant 0 : index
    %c0_10 = arith.constant 0 : index
    %10 = vector.load %arg5[%c0_9, %c0_10] : memref<8x1xf32, #tpu.memory_space<vmem>>, vector<8x1xf32>
    %11 = vector.broadcast %10 : vector<8x1xf32> to vector<8x128xf32>
    %12 = arith.addf %9, %11 : vector<8x128xf32>
    %cst_11 = arith.constant 5.000000e-01 : f32
    %13 = vector.broadcast %cst_11 : f32 to vector<8x128xf32>
    %14 = arith.mulf %13, %12 : vector<8x128xf32>
    %15 = math.tanh %14 : vector<8x128xf32>
    %cst_12 = arith.constant 5.000000e-01 : f32
    %16 = vector.broadcast %cst_12 : f32 to vector<8x128xf32>
    %17 = arith.mulf %16, %15 : vector<8x128xf32>
    %cst_13 = arith.constant 5.000000e-01 : f32
    %18 = vector.broadcast %cst_13 : f32 to vector<8x128xf32>
    %19 = arith.addf %17, %18 : vector<8x128xf32>
    %c0_14 = arith.constant 0 : index
    %c0_15 = arith.constant 0 : index
    %20 = vector.load %arg6[%c0_14, %c0_15] : memref<8x1xf32, #tpu.memory_space<vmem>>, vector<8x1xf32>
    %21 = vector.broadcast %20 : vector<8x1xf32> to vector<8x128xf32>
    %22 = arith.mulf %19, %21 : vector<8x128xf32>
    %c0_16 = arith.constant 0 : index
    %c0_17 = arith.constant 0 : index
    %23 = vector.load %arg7[%c0_16, %c0_17] : memref<8x1xf32, #tpu.memory_space<vmem>>, vector<8x1xf32>
    %24 = vector.broadcast %23 : vector<8x1xf32> to vector<8x128xf32>
    %25 = arith.mulf %12, %24 : vector<8x128xf32>
    %26 = arith.addf %22, %25 : vector<8x128xf32>
    %c0_18 = arith.constant 0 : index
    %c0_19 = arith.constant 0 : index
    %27 = vector.load %arg8[%c0_18, %c0_19] : memref<8x128xf32, #tpu.memory_space<vmem>>, vector<8x128xf32>
    tpu.vector_store %arg8[%c0_18, %c0_19], %26 {strides = array<i32>} : memref<8x128xf32, #tpu.memory_space<vmem>>, vector<8x128xf32>,
    return
  }
  func.func @transform_0(%arg0: i32) -> (i32, i32) {
    %c0_i32 = arith.constant 0 : i32
    %c0_i32_0 = arith.constant 0 : i32
    return %c0_i32, %arg0 : i32, i32
  }
  func.func @transform_1(%arg0: i32) -> (i32, i32) {
    %c0_i32 = arith.constant 0 : i32
    %c0_i32_0 = arith.constant 0 : i32
    %c0_i32_1 = arith.constant 0 : i32
    return %c0_i32, %c0_i32_0 : i32, i32
  }
  func.func @transform_2(%arg0: i32) -> (i32, i32) {
    %c0_i32 = arith.constant 0 : i32
    %c0_i32_0 = arith.constant 0 : i32
    %c0_i32_1 = arith.constant 0 : i32
    return %c0_i32, %c0_i32_0 : i32, i32
  }
  func.func @transform_3(%arg0: i32) -> (i32, i32) {
    %c0_i32 = arith.constant 0 : i32
    %c0_i32_0 = arith.constant 0 : i32
    %c0_i32_1 = arith.constant 0 : i32
    return %c0_i32, %c0_i32_0 : i32, i32
  }
  func.func @transform_4(%arg0: i32) -> (i32, i32) {
    %c0_i32 = arith.constant 0 : i32
    %c0_i32_0 = arith.constant 0 : i32
    %c0_i32_1 = arith.constant 0 : i32
    return %c0_i32, %c0_i32_0 : i32, i32
  }
  func.func @transform_5(%arg0: i32) -> (i32, i32) {
    %c0_i32 = arith.constant 0 : i32
    %c0_i32_0 = arith.constant 0 : i32
    %c0_i32_1 = arith.constant 0 : i32
    return %c0_i32, %c0_i32_0 : i32, i32
  }
  func.func @transform_6(%arg0: i32) -> (i32, i32) {
    %c0_i32 = arith.constant 0 : i32
    %c0_i32_0 = arith.constant 0 : i32
    %c0_i32_1 = arith.constant 0 : i32
    return %c0_i32, %c0_i32_0 : i32, i32
  }
  func.func @transform_7(%arg0: i32) -> (i32, i32) {
    %c0_i32 = arith.constant 0 : i32
    %c0_i32_0 = arith.constant 0 : i32
    return %c0_i32, %arg0 : i32, i32
  }
}

</mosaic_0001>

<llo_original>
// kernel: tpu_custom_call.1
$region0: #{tpu_custom_call.1}
  #allocation0 [shape = 'u32[]', space=smem, size = 0x4, offset = 0x4, fixed_abs, tag = 'smem constant byte address 0x4 - core index']
  #allocation1 [shape = 'u32[72,128]{1,0:T(1,128)}', space=vmem, size = 0x9000, scoped, tag = 'internal scratch']
  %s0 = inlined_call_operand.vmem [shape: f32[4,256], index: 0, kind: input, shape index: {}]
  %s1 = inlined_call_operand.vmem [shape: f32[256,4], index: 1, kind: input, shape index: {}]
  %s2 = inlined_call_operand.vmem [shape: f32[256,1], index: 2, kind: input, shape index: {}]
  %s3 = inlined_call_operand.vmem [shape: f32[8,256], index: 3, kind: input, shape index: {}]
  %s4 = inlined_call_operand.vmem [shape: f32[8,1], index: 4, kind: input, shape index: {}]
  %s5 = inlined_call_operand.vmem [shape: f32[8,1], index: 5, kind: input, shape index: {}]
  %s6 = inlined_call_operand.vmem [shape: f32[8,1], index: 6, kind: input, shape index: {}]
  %s7 = inlined_call_operand.hbm [shape: f32[8,256], index: 7, kind: output, shape index: {}]
  %s8 = sld [smem:[#allocation0]]
  $region61: #{tpu_custom_call.1} parent=0
    _
  %s10 = ssub.s32 1, %s8
  %s11 = scalar_select 0, %s10, %s8
  $region1: #{tpu_custom_call.1} parent=0
    #allocation2 [shape = 'u8[8192]{0}', space=vmem, size = 0x2000, scoped, tag = 'output window, operand 0']
    #allocation3 [shape = 's32[2]{0}', space=sflag, size = 0x8, scoped, tag = 'scoped memory for tpu_custom_call.1']
    %12 = vsyncpa [#allocation3], 0
    %s13 = scalar_lea.sflag [#allocation3], 1
    %14 = vsyncpa %s13, 0
    loop: start=0, step=1, limit=4
    $region2: #{tpu_custom_call.1} parent=1 // loop_pre_header
      _
    $region3: #{tpu_custom_call.1} parent=1 // loop_header
      %s16 = sphi 0, %s20
      %p17 = scmp.ge.s32.totalorder %s16, 4
      %s26 = sphi 0, %s28
      %s29 = sphi 0, %s26
      %s30 = sphi 0, %s29
      %s46 = sphi 0, %s30
      %s50 = sphi 0, %s50
      %s52 = sphi 0, %s50
      %s53 = sphi 0, %s52
      %s67 = sphi 0, %s53
      %s71 = sphi 0, %s71
      %s73 = sphi 0, %s71
      %s74 = sphi 0, %s73
      %s88 = sphi 0, %s74
      %s92 = sphi 0, %s92
      %s94 = sphi 0, %s92
      %s95 = sphi 0, %s94
      %s109 = sphi 0, %s95
      %s113 = sphi 0, %s113
      %s115 = sphi 0, %s113
      %s116 = sphi 0, %s115
      %s130 = sphi 0, %s116
      %s134 = sphi 0, %s134
      %s136 = sphi 0, %s134
      %s137 = sphi 0, %s136
      %s151 = sphi 0, %s137
      %s155 = sphi 0, %s155
      %s157 = sphi 0, %s155
      %s158 = sphi 0, %s157
      %s172 = sphi 0, %s158
      %s178 = sphi 0, %s180
      %s181 = sphi 0, %s178
      %s182 = sphi 0, %s181
      %s198 = sphi 0, %s182
    $region4: #{tpu_custom_call.1} parent=1 // loop_header_branch
      %19 = sbr.rel (%p17) target = $region8
    $region5: #{tpu_custom_call.1} parent=1 // loop_body
      %s21 = ssub.s32 %s16, 1
      %s22 = ssub.s32 %s16, 2
      %s23 = sadd.s32 %s16, 1
      %s24 = ssub.s32 %s16, %s23
      %p25 = scmp.eq.s32.totalorder %s24, 0
      %s27 = sadd.s32 %s26, 1
      %s28 = scalar_select %p25, %s26, %s27
      %p31 = pneg %p25
      %p32 = scmp.eq.s32.totalorder %s16, 1
      %p33 = por %p31, %p32
      %p34 = scmp.ne.s32.totalorder %s26, %s29
      %p35 = scmp.eq.s32.totalorder %s16, 0
      %p36 = por %p34, %p35
      %p37 = scmp.ne.s32.totalorder %s26, %s29
      %p38 = scmp.eq.s32.totalorder %s21, 1
      %p39 = por %p37, %p38
      %p40 = scmp.ne.s32.totalorder %s29, %s30
      %p41 = scmp.eq.s32.totalorder %s21, 0
      %p42 = por %p40, %p41
      %p43 = scmp.ne.s32.totalorder %s29, %s30
      %p44 = scmp.eq.s32.totalorder %s22, 1
      %p45 = por %p43, %p44
      %p47 = scmp.ne.s32.totalorder %s30, %s46
      %p48 = scmp.eq.s32.totalorder %s22, 0
      %p49 = por %p47, %p48
      %s51 = sadd.s32 %s50, 1
      %p54 = scmp.eq.s32.totalorder %s16, 1
      %p55 = scmp.ne.s32.totalorder %s50, %s52
      %p56 = scmp.eq.s32.totalorder %s16, 0
      %p57 = por %p55, %p56
      %p58 = scmp.ne.s32.totalorder %s50, %s52
      %p59 = scmp.eq.s32.totalorder %s21, 1
      %p60 = por %p58, %p59
      %p61 = scmp.ne.s32.totalorder %s52, %s53
      %p62 = scmp.eq.s32.totalorder %s21, 0
      %p63 = por %p61, %p62
      %p64 = scmp.ne.s32.totalorder %s52, %s53
      %p65 = scmp.eq.s32.totalorder %s22, 1
      %p66 = por %p64, %p65
      %p68 = scmp.ne.s32.totalorder %s53, %s67
      %p69 = scmp.eq.s32.totalorder %s22, 0
      %p70 = por %p68, %p69
      %s72 = sadd.s32 %s71, 1
      %p75 = scmp.eq.s32.totalorder %s16, 1
      %p76 = scmp.ne.s32.totalorder %s71, %s73
      %p77 = scmp.eq.s32.totalorder %s16, 0
      %p78 = por %p76, %p77
      %p79 = scmp.ne.s32.totalorder %s71, %s73
      %p80 = scmp.eq.s32.totalorder %s21, 1
      %p81 = por %p79, %p80
      %p82 = scmp.ne.s32.totalorder %s73, %s74
      %p83 = scmp.eq.s32.totalorder %s21, 0
      %p84 = por %p82, %p83
      %p85 = scmp.ne.s32.totalorder %s73, %s74
      %p86 = scmp.eq.s32.totalorder %s22, 1
      %p87 = por %p85, %p86
      %p89 = scmp.ne.s32.totalorder %s74, %s88
      %p90 = scmp.eq.s32.totalorder %s22, 0
      %p91 = por %p89, %p90
      %s93 = sadd.s32 %s92, 1
      %p96 = scmp.eq.s32.totalorder %s16, 1
      %p97 = scmp.ne.s32.totalorder %s92, %s94
      %p98 = scmp.eq.s32.totalorder %s16, 0
      %p99 = por %p97, %p98
      %p100 = scmp.ne.s32.totalorder %s92, %s94
      %p101 = scmp.eq.s32.totalorder %s21, 1
      %p102 = por %p100, %p101
      %p103 = scmp.ne.s32.totalorder %s94, %s95
      %p104 = scmp.eq.s32.totalorder %s21, 0
      %p105 = por %p103, %p104
      %p106 = scmp.ne.s32.totalorder %s94, %s95
      %p107 = scmp.eq.s32.totalorder %s22, 1
      %p108 = por %p106, %p107
      %p110 = scmp.ne.s32.totalorder %s95, %s109
      %p111 = scmp.eq.s32.totalorder %s22, 0
      %p112 = por %p110, %p111
      %s114 = sadd.s32 %s113, 1
      %p117 = scmp.eq.s32.totalorder %s16, 1
      %p118 = scmp.ne.s32.totalorder %s113, %s115
      %p119 = scmp.eq.s32.totalorder %s16, 0
      %p120 = por %p118, %p119
      %p121 = scmp.ne.s32.totalorder %s113, %s115
      %p122 = scmp.eq.s32.totalorder %s21, 1
      %p123 = por %p121, %p122
      %p124 = scmp.ne.s32.totalorder %s115, %s116
      %p125 = scmp.eq.s32.totalorder %s21, 0
      %p126 = por %p124, %p125
      %p127 = scmp.ne.s32.totalorder %s115, %s116
      %p128 = scmp.eq.s32.totalorder %s22, 1
      %p129 = por %p127, %p128
      %p131 = scmp.ne.s32.totalorder %s116, %s130
      %p132 = scmp.eq.s32.totalorder %s22, 0
      %p133 = por %p131, %p132
      %s135 = sadd.s32 %s134, 1
      %p138 = scmp.eq.s32.totalorder %s16, 1
      %p139 = scmp.ne.s32.totalorder %s134, %s136
      %p140 = scmp.eq.s32.totalorder %s16, 0
      %p141 = por %p139, %p140
      %p142 = scmp.ne.s32.totalorder %s134, %s136
      %p143 = scmp.eq.s32.totalorder %s21, 1
      %p144 = por %p142, %p143
      %p145 = scmp.ne.s32.totalorder %s136, %s137
      %p146 = scmp.eq.s32.totalorder %s21, 0
      %p147 = por %p145, %p146
      %p148 = scmp.ne.s32.totalorder %s136, %s137
      %p149 = scmp.eq.s32.totalorder %s22, 1
      %p150 = por %p148, %p149
      %p152 = scmp.ne.s32.totalorder %s137, %s151
      %p153 = scmp.eq.s32.totalorder %s22, 0
      %p154 = por %p152, %p153
      %s156 = sadd.s32 %s155, 1
      %p159 = scmp.eq.s32.totalorder %s16, 1
      %p160 = scmp.ne.s32.totalorder %s155, %s157
      %p161 = scmp.eq.s32.totalorder %s16, 0
      %p162 = por %p160, %p161
      %p163 = scmp.ne.s32.totalorder %s155, %s157
      %p164 = scmp.eq.s32.totalorder %s21, 1
      %p165 = por %p163, %p164
      %p166 = scmp.ne.s32.totalorder %s157, %s158
      %p167 = scmp.eq.s32.totalorder %s21, 0
      %p168 = por %p166, %p167
      %p169 = scmp.ne.s32.totalorder %s157, %s158
      %p170 = scmp.eq.s32.totalorder %s22, 1
      %p171 = por %p169, %p170
      %p173 = scmp.ne.s32.totalorder %s158, %s172
      %p174 = scmp.eq.s32.totalorder %s22, 0
      %p175 = por %p173, %p174
      %s176 = ssub.s32 %s16, %s23
      %p177 = scmp.eq.s32.totalorder %s176, 0
      %s179 = sadd.s32 %s178, 1
      %s180 = scalar_select %p177, %s178, %s179
      %p183 = pneg %p177
      %p184 = scmp.eq.s32.totalorder %s16, 1
      %p185 = por %p183, %p184
      %p186 = scmp.ne.s32.totalorder %s178, %s181
      %p187 = scmp.eq.s32.totalorder %s16, 0
      %p188 = por %p186, %p187
      %p189 = scmp.ne.s32.totalorder %s178, %s181
      %p190 = scmp.eq.s32.totalorder %s21, 1
      %p191 = por %p189, %p190
      %p192 = scmp.ne.s32.totalorder %s181, %s182
      %p193 = scmp.eq.s32.totalorder %s21, 0
      %p194 = por %p192, %p193
      %p195 = scmp.ne.s32.totalorder %s181, %s182
      %p196 = scmp.eq.s32.totalorder %s22, 1
      %p197 = por %p195, %p196
      %p199 = scmp.ne.s32.totalorder %s182, %s198
      %p200 = scmp.eq.s32.totalorder %s22, 0
      %p201 = por %p199, %p200
      %p202 = scmp.le.s32.totalorder 1, %s16
      %p203 = scmp.lt.s32.totalorder %s16, 3
      %p204 = pnand %p202, %p203
      %p205 = pneg %p204
      // Predicated region
      $region9: #{tpu_custom_call.1} parent=5 // pred_check
        _
      $region10: #{tpu_custom_call.1} parent=5 // pred_check_branch
        %207 = sbr.rel (%p204) target = $region12
      $region11: #{tpu_custom_call.1} parent=5 // pred_region
        %s208 = ssub.s32 %s16, 1
        // Predicated region
        $region13: #{tpu_custom_call.1} parent=11 // pred_check
          %p209 = pneg %p63
        $region14: #{tpu_custom_call.1} parent=11 // pred_check_branch
          %211 = sbr.rel (%p209) target = $region16
        $region15: #{tpu_custom_call.1} parent=11 // pred_region
          _
        $region16: #{tpu_custom_call.1} parent=11 // pred_fallthru
          _
        // Predicated region
        $region17: #{tpu_custom_call.1} parent=11 // pred_check
          %p212 = pneg %p84
        $region18: #{tpu_custom_call.1} parent=11 // pred_check_branch
          %214 = sbr.rel (%p212) target = $region20
        $region19: #{tpu_custom_call.1} parent=11 // pred_region
          _
        $region20: #{tpu_custom_call.1} parent=11 // pred_fallthru
          _
        // Predicated region
        $region21: #{tpu_custom_call.1} parent=11 // pred_check
          %p215 = pneg %p105
        $region22: #{tpu_custom_call.1} parent=11 // pred_check_branch
          %217 = sbr.rel (%p215) target = $region24
        $region23: #{tpu_custom_call.1} parent=11 // pred_region
          _
        $region24: #{tpu_custom_call.1} parent=11 // pred_fallthru
          _
        // Predicated region
        $region25: #{tpu_custom_call.1} parent=11 // pred_check
          %p218 = pneg %p126
        $region26: #{tpu_custom_call.1} parent=11 // pred_check_branch
          %220 = sbr.rel (%p218) target = $region28
        $region27: #{tpu_custom_call.1} parent=11 // pred_region
          _
        $region28: #{tpu_custom_call.1} parent=11 // pred_fallthru
          _
        // Predicated region
        $region29: #{tpu_custom_call.1} parent=11 // pred_check
          %p221 = pneg %p147
        $region30: #{tpu_custom_call.1} parent=11 // pred_check_branch
          %223 = sbr.rel (%p221) target = $region32
        $region31: #{tpu_custom_call.1} parent=11 // pred_region
          _
        $region32: #{tpu_custom_call.1} parent=11 // pred_fallthru
          _
        // Predicated region
        $region33: #{tpu_custom_call.1} parent=11 // pred_check
          %p224 = pneg %p168
        $region34: #{tpu_custom_call.1} parent=11 // pred_check_branch
          %226 = sbr.rel (%p224) target = $region36
        $region35: #{tpu_custom_call.1} parent=11 // pred_region
          _
        $region36: #{tpu_custom_call.1} parent=11 // pred_fallthru
          _
      $region12: #{tpu_custom_call.1} parent=5 // pred_fallthru
        _
      %p227 = scmp.lt.s32.totalorder %s16, 2
      // Predicated region
      $region37: #{tpu_custom_call.1} parent=5 // pred_check
        %p228 = pneg %p227
      $region38: #{tpu_custom_call.1} parent=5 // pred_check_branch
        %230 = sbr.rel (%p228) target = $region40
      $region39: #{tpu_custom_call.1} parent=5 // pred_region
        // Predicated region
        $region41: #{tpu_custom_call.1} parent=39 // pred_check
          %p231 = pneg %p36
        $region42: #{tpu_custom_call.1} parent=39 // pred_check_branch
          %233 = sbr.rel (%p231) target = $region44
        $region43: #{tpu_custom_call.1} parent=39 // pred_region
          %p234 = scmp.lt.s32.totalorder %s16, 1
          %s235 = scalar_select %p234, %s16, 1
          %s236 = smul.addr %s235, 4
          %s237 = scalar_lea.vmem %s0, %s236
        $region44: #{tpu_custom_call.1} parent=39 // pred_fallthru
          _
      $region40: #{tpu_custom_call.1} parent=5 // pred_fallthru
        _
      %p238 = scmp.le.s32.totalorder 1, %s16
      %p239 = scmp.lt.s32.totalorder %s16, 3
      %p240 = pnand %p238, %p239
      %p241 = pneg %p240
      // Predicated region
      $region45: #{tpu_custom_call.1} parent=5 // pred_check
        _
      $region46: #{tpu_custom_call.1} parent=5 // pred_check_branch
        %243 = sbr.rel (%p240) target = $region48
      $region47: #{tpu_custom_call.1} parent=5 // pred_region
        %s244 = ssub.s32 %s16, 1
        %p245 = scmp.lt.s32.totalorder %s21, 1
        %s246 = scalar_select %p245, %s21, 1
        %s247 = smul.addr %s246, 4
        %s248 = scalar_lea.vmem %s0, %s247
        %p249 = pneg %p42
        %p250 = pneg %p39
        %p251 = pneg %p63
        %p252 = pneg %p60
        %p253 = pneg %p84
        %p254 = pneg %p81
        %p255 = pneg %p105
        %p256 = pneg %p102
        %p257 = pneg %p126
        %p258 = pneg %p123
        %p259 = pneg %p147
        %p260 = pneg %p144
        %p261 = pneg %p168
        %p262 = pneg %p165
        %p263 = pneg %p194
        %p264 = pneg %p191
        %s265 = sand.u32 %s181, 1
        %s266 = scalar_lea.sflag [#allocation3], %s265
        %s267 = sand.u32 %s181, 1
        %s268 = smul.addr %s267, 8
        %s269 = scalar_lea.vmem [#allocation2], %s268
        %p270 = scmp.lt.s32.totalorder %s21, 1
        %s271 = scalar_select %p270, %s21, 1
        %s272 = smul.addr %s271, 4
        %s273 = scalar_lea.vmem %s0, %s272
        %v274 = vld [vmem:[%s273] sm:$0xf]
        %v275 = vld [vmem:[%s1] sm:$0xff]
        %v276 = vld [vmem:[%s1 + $0x8] sm:$0xff]
        %v277 = vld [vmem:[%s1 + $0x10] sm:$0xff]
        %v278 = vld [vmem:[%s1 + $0x18] sm:$0xff]
        %v279 = vld [vmem:[%s1 + $0x20] sm:$0xff]
        %v280 = vld [vmem:[%s1 + $0x28] sm:$0xff]
        %v281 = vld [vmem:[%s1 + $0x30] sm:$0xff]
        %v282 = vld [vmem:[%s1 + $0x38] sm:$0xff]
        %v283 = vld [vmem:[%s1 + $0x40] sm:$0xff]
        %v284 = vld [vmem:[%s1 + $0x48] sm:$0xff]
        %v285 = vld [vmem:[%s1 + $0x50] sm:$0xff]
        %v286 = vld [vmem:[%s1 + $0x58] sm:$0xff]
        %v287 = vld [vmem:[%s1 + $0x60] sm:$0xff]
        %v288 = vld [vmem:[%s1 + $0x68] sm:$0xff]
        %v289 = vld [vmem:[%s1 + $0x70] sm:$0xff]
        %v290 = vld [vmem:[%s1 + $0x78] sm:$0xff]
        %v291 = vld [vmem:[%s1 + $0x80] sm:$0xff]
        %v292 = vld [vmem:[%s1 + $0x88] sm:$0xff]
        %v293 = vld [vmem:[%s1 + $0x90] sm:$0xff]
        %v294 = vld [vmem:[%s1 + $0x98] sm:$0xff]
        %v295 = vld [vmem:[%s1 + $0xa0] sm:$0xff]
        %v296 = vld [vmem:[%s1 + $0xa8] sm:$0xff]
        %v297 = vld [vmem:[%s1 + $0xb0] sm:$0xff]
        %v298 = vld [vmem:[%s1 + $0xb8] sm:$0xff]
        %v299 = vld [vmem:[%s1 + $0xc0] sm:$0xff]
        %v300 = vld [vmem:[%s1 + $0xc8] sm:$0xff]
        %v301 = vld [vmem:[%s1 + $0xd0] sm:$0xff]
        %v302 = vld [vmem:[%s1 + $0xd8] sm:$0xff]
        %v303 = vld [vmem:[%s1 + $0xe0] sm:$0xff]
        %v304 = vld [vmem:[%s1 + $0xe8] sm:$0xff]
        %v305 = vld [vmem:[%s1 + $0xf0] sm:$0xff]
        %v306 = vld [vmem:[%s1 + $0xf8] sm:$0xff]
        %v307 = vld [vmem:[%s2] sm:$0xff]
        %v308 = vld [vmem:[%s2 + $0x8] sm:$0xff]
        %v309 = vld [vmem:[%s2 + $0x10] sm:$0xff]
        %v310 = vld [vmem:[%s2 + $0x18] sm:$0xff]
        %v311 = vld [vmem:[%s2 + $0x20] sm:$0xff]
        %v312 = vld [vmem:[%s2 + $0x28] sm:$0xff]
        %v313 = vld [vmem:[%s2 + $0x30] sm:$0xff]
        %v314 = vld [vmem:[%s2 + $0x38] sm:$0xff]
        %v315 = vld [vmem:[%s2 + $0x40] sm:$0xff]
        %v316 = vld [vmem:[%s2 + $0x48] sm:$0xff]
        %v317 = vld [vmem:[%s2 + $0x50] sm:$0xff]
        %v318 = vld [vmem:[%s2 + $0x58] sm:$0xff]
        %v319 = vld [vmem:[%s2 + $0x60] sm:$0xff]
        %v320 = vld [vmem:[%s2 + $0x68] sm:$0xff]
        %v321 = vld [vmem:[%s2 + $0x70] sm:$0xff]
        %v322 = vld [vmem:[%s2 + $0x78] sm:$0xff]
        %v323 = vld [vmem:[%s2 + $0x80] sm:$0xff]
        %v324 = vld [vmem:[%s2 + $0x88] sm:$0xff]
        %v325 = vld [vmem:[%s2 + $0x90] sm:$0xff]
        %v326 = vld [vmem:[%s2 + $0x98] sm:$0xff]
        %v327 = vld [vmem:[%s2 + $0xa0] sm:$0xff]
        %v328 = vld [vmem:[%s2 + $0xa8] sm:$0xff]
        %v329 = vld [vmem:[%s2 + $0xb0] sm:$0xff]
        %v330 = vld [vmem:[%s2 + $0xb8] sm:$0xff]
        %v331 = vld [vmem:[%s2 + $0xc0] sm:$0xff]
        %v332 = vld [vmem:[%s2 + $0xc8] sm:$0xff]
        %v333 = vld [vmem:[%s2 + $0xd0] sm:$0xff]
        %v334 = vld [vmem:[%s2 + $0xd8] sm:$0xff]
        %v335 = vld [vmem:[%s2 + $0xe0] sm:$0xff]
        %v336 = vld [vmem:[%s2 + $0xe8] sm:$0xff]
        %v337 = vld [vmem:[%s2 + $0xf0] sm:$0xff]
        %v338 = vld [vmem:[%s2 + $0xf8] sm:$0xff]
        %340 = vset.pattern.permute.xlu0 0
        %341 = vperm.xlu0 %340, %v307
        %v342 = vpop.permute.xlu0 %341
        %345 = vset.pattern.permute.xlu0 0
        %346 = vperm.xlu0 %345, %v308
        %v347 = vpop.permute.xlu0 %346
        %350 = vset.pattern.permute.xlu0 0
        %351 = vperm.xlu0 %350, %v309
        %v352 = vpop.permute.xlu0 %351
        %355 = vset.pattern.permute.xlu0 0
        %356 = vperm.xlu0 %355, %v310
        %v357 = vpop.permute.xlu0 %356
        %360 = vset.pattern.permute.xlu0 0
        %361 = vperm.xlu0 %360, %v311
        %v362 = vpop.permute.xlu0 %361
        %365 = vset.pattern.permute.xlu0 0
        %366 = vperm.xlu0 %365, %v312
        %v367 = vpop.permute.xlu0 %366
        %370 = vset.pattern.permute.xlu0 0
        %371 = vperm.xlu0 %370, %v313
        %v372 = vpop.permute.xlu0 %371
        %375 = vset.pattern.permute.xlu0 0
        %376 = vperm.xlu0 %375, %v314
        %v377 = vpop.permute.xlu0 %376
        %380 = vset.pattern.permute.xlu0 0
        %381 = vperm.xlu0 %380, %v315
        %v382 = vpop.permute.xlu0 %381
        %385 = vset.pattern.permute.xlu0 0
        %386 = vperm.xlu0 %385, %v316
        %v387 = vpop.permute.xlu0 %386
        %390 = vset.pattern.permute.xlu0 0
        %391 = vperm.xlu0 %390, %v317
        %v392 = vpop.permute.xlu0 %391
        %395 = vset.pattern.permute.xlu0 0
        %396 = vperm.xlu0 %395, %v318
        %v397 = vpop.permute.xlu0 %396
        %400 = vset.pattern.permute.xlu0 0
        %401 = vperm.xlu0 %400, %v319
        %v402 = vpop.permute.xlu0 %401
        %405 = vset.pattern.permute.xlu0 0
        %406 = vperm.xlu0 %405, %v320
        %v407 = vpop.permute.xlu0 %406
        %410 = vset.pattern.permute.xlu0 0
        %411 = vperm.xlu0 %410, %v321
        %v412 = vpop.permute.xlu0 %411
        %415 = vset.pattern.permute.xlu0 0
        %416 = vperm.xlu0 %415, %v322
        %v417 = vpop.permute.xlu0 %416
        %420 = vset.pattern.permute.xlu0 0
        %421 = vperm.xlu0 %420, %v323
        %v422 = vpop.permute.xlu0 %421
        %425 = vset.pattern.permute.xlu0 0
        %426 = vperm.xlu0 %425, %v324
        %v427 = vpop.permute.xlu0 %426
        %430 = vset.pattern.permute.xlu0 0
        %431 = vperm.xlu0 %430, %v325
        %v432 = vpop.permute.xlu0 %431
        %435 = vset.pattern.permute.xlu0 0
        %436 = vperm.xlu0 %435, %v326
        %v437 = vpop.permute.xlu0 %436
        %440 = vset.pattern.permute.xlu0 0
        %441 = vperm.xlu0 %440, %v327
        %v442 = vpop.permute.xlu0 %441
        %445 = vset.pattern.permute.xlu0 0
        %446 = vperm.xlu0 %445, %v328
        %v447 = vpop.permute.xlu0 %446
        %450 = vset.pattern.permute.xlu0 0
        %451 = vperm.xlu0 %450, %v329
        %v452 = vpop.permute.xlu0 %451
        %455 = vset.pattern.permute.xlu0 0
        %456 = vperm.xlu0 %455, %v330
        %v457 = vpop.permute.xlu0 %456
        %460 = vset.pattern.permute.xlu0 0
        %461 = vperm.xlu0 %460, %v331
        %v462 = vpop.permute.xlu0 %461
        %465 = vset.pattern.permute.xlu0 0
        %466 = vperm.xlu0 %465, %v332
        %v467 = vpop.permute.xlu0 %466
        %470 = vset.pattern.permute.xlu0 0
        %471 = vperm.xlu0 %470, %v333
        %v472 = vpop.permute.xlu0 %471
        %475 = vset.pattern.permute.xlu0 0
        %476 = vperm.xlu0 %475, %v334
        %v477 = vpop.permute.xlu0 %476
        %480 = vset.pattern.permute.xlu0 0
        %481 = vperm.xlu0 %480, %v335
        %v482 = vpop.permute.xlu0 %481
        %485 = vset.pattern.permute.xlu0 0
        %486 = vperm.xlu0 %485, %v336
        %v487 = vpop.permute.xlu0 %486
        %490 = vset.pattern.permute.xlu0 0
        %491 = vperm.xlu0 %490, %v337
        %v492 = vpop.permute.xlu0 %491
        %495 = vset.pattern.permute.xlu0 0
        %496 = vperm.xlu0 %495, %v338
        %v497 = vpop.permute.xlu0 %496
        %vm499 = vcmask 31744
        %v501 = vsel %vm499, %v275, 0
        %v504 = vsel %vm499, %v276, 0
        %v507 = vsel %vm499, %v277, 0
        %v510 = vsel %vm499, %v278, 0
        %v513 = vsel %vm499, %v279, 0
        %v516 = vsel %vm499, %v280, 0
        %v519 = vsel %vm499, %v281, 0
        %v522 = vsel %vm499, %v282, 0
        %v525 = vsel %vm499, %v283, 0
        %v528 = vsel %vm499, %v284, 0
        %v531 = vsel %vm499, %v285, 0
        %v534 = vsel %vm499, %v286, 0
        %v537 = vsel %vm499, %v287, 0
        %v540 = vsel %vm499, %v288, 0
        %v543 = vsel %vm499, %v289, 0
        %v546 = vsel %vm499, %v290, 0
        %v549 = vsel %vm499, %v291, 0
        %v552 = vsel %vm499, %v292, 0
        %v555 = vsel %vm499, %v293, 0
        %v558 = vsel %vm499, %v294, 0
        %v561 = vsel %vm499, %v295, 0
        %v564 = vsel %vm499, %v296, 0
        %v567 = vsel %vm499, %v297, 0
        %v570 = vsel %vm499, %v298, 0
        %v573 = vsel %vm499, %v299, 0
        %v576 = vsel %vm499, %v300, 0
        %v579 = vsel %vm499, %v301, 0
        %v582 = vsel %vm499, %v302, 0
        %v585 = vsel %vm499, %v303, 0
        %v588 = vsel %vm499, %v304, 0
        %v591 = vsel %vm499, %v305, 0
        %v594 = vsel %vm499, %v306, 0
        %vm596 = vcmask 1043456
        %v598 = vsel %vm596, %v274, 0
        %600 = vmatpush.msra.mxu0 0.0
        %601 = vmatpush.msra.mxu0 0.0
        %602 = vmatpush.msra.mxu0 0.0
        %603 = vmatpush.msra.mxu0 0.0
        %604 = vmatpush.msra.mxu0 0.0
        %605 = vmatpush.msra.mxu0 0.0
        %606 = vmatpush.msra.mxu0 0.0
        %607 = vmatpush.msra.mxu0 0.0
        %608 = vmatpush.msra.mxu0 0.0
        %609 = vmatpush.msra.mxu0 0.0
        %610 = vmatpush.msra.mxu0 0.0
        %611 = vmatpush.msra.mxu0 0.0
        %612 = vmatpush.msra.mxu0 0.0
        %613 = vmatpush.msra.mxu0 0.0
        %614 = vmatpush.msra.mxu0 0.0
        %615 = vmatpush.msra.mxu0 %v598
        %616 = vmatmul.f32.gmra.mxu0 %v501
        %v617 = vpop.f32.mrf.mxu0
        %v618 = vadd.f32 %v342, %v617
        %619 = vmatmul.f32.gmra.mxu0 %v504
        %v620 = vpop.f32.mrf.mxu0
        %v621 = vadd.f32 %v347, %v620
        %622 = vmatmul.f32.gmra.mxu0 %v507
        %v623 = vpop.f32.mrf.mxu0
        %v624 = vadd.f32 %v352, %v623
        %625 = vmatmul.f32.gmra.mxu0 %v510
        %v626 = vpop.f32.mrf.mxu0
        %v627 = vadd.f32 %v357, %v626
        %628 = vmatmul.f32.gmra.mxu0 %v513
        %v629 = vpop.f32.mrf.mxu0
        %v630 = vadd.f32 %v362, %v629
        %631 = vmatmul.f32.gmra.mxu0 %v516
        %v632 = vpop.f32.mrf.mxu0
        %v633 = vadd.f32 %v367, %v632
        %634 = vmatmul.f32.gmra.mxu0 %v519
        %v635 = vpop.f32.mrf.mxu0
        %v636 = vadd.f32 %v372, %v635
        %637 = vmatmul.f32.gmra.mxu0 %v522
        %v638 = vpop.f32.mrf.mxu0
        %v639 = vadd.f32 %v377, %v638
        %640 = vmatmul.f32.gmra.mxu0 %v525
        %v641 = vpop.f32.mrf.mxu0
        %v642 = vadd.f32 %v382, %v641
        %643 = vmatmul.f32.gmra.mxu0 %v528
        %v644 = vpop.f32.mrf.mxu0
        %v645 = vadd.f32 %v387, %v644
        %646 = vmatmul.f32.gmra.mxu0 %v531
        %v647 = vpop.f32.mrf.mxu0
        %v648 = vadd.f32 %v392, %v647
        %649 = vmatmul.f32.gmra.mxu0 %v534
        %v650 = vpop.f32.mrf.mxu0
        %v651 = vadd.f32 %v397, %v650
        %652 = vmatmul.f32.gmra.mxu0 %v537
        %v653 = vpop.f32.mrf.mxu0
        %v654 = vadd.f32 %v402, %v653
        %655 = vmatmul.f32.gmra.mxu0 %v540
        %v656 = vpop.f32.mrf.mxu0
        %v657 = vadd.f32 %v407, %v656
        %658 = vmatmul.f32.gmra.mxu0 %v543
        %v659 = vpop.f32.mrf.mxu0
        %v660 = vadd.f32 %v412, %v659
        %661 = vmatmul.f32.gmra.mxu0 %v546
        %v662 = vpop.f32.mrf.mxu0
        %v663 = vadd.f32 %v417, %v662
        %664 = vmatmul.f32.gmra.mxu0 %v549
        %v665 = vpop.f32.mrf.mxu0
        %v666 = vadd.f32 %v422, %v665
        %667 = vmatmul.f32.gmra.mxu0 %v552
        %v668 = vpop.f32.mrf.mxu0
        %v669 = vadd.f32 %v427, %v668
        %670 = vmatmul.f32.gmra.mxu0 %v555
        %v671 = vpop.f32.mrf.mxu0
        %v672 = vadd.f32 %v432, %v671
        %673 = vmatmul.f32.gmra.mxu0 %v558
        %v674 = vpop.f32.mrf.mxu0
        %v675 = vadd.f32 %v437, %v674
        %676 = vmatmul.f32.gmra.mxu0 %v561
        %v677 = vpop.f32.mrf.mxu0
        %v678 = vadd.f32 %v442, %v677
        %679 = vmatmul.f32.gmra.mxu0 %v564
        %v680 = vpop.f32.mrf.mxu0
        %v681 = vadd.f32 %v447, %v680
        %682 = vmatmul.f32.gmra.mxu0 %v567
        %v683 = vpop.f32.mrf.mxu0
        %v684 = vadd.f32 %v452, %v683
        %685 = vmatmul.f32.gmra.mxu0 %v570
        %v686 = vpop.f32.mrf.mxu0
        %v687 = vadd.f32 %v457, %v686
        %688 = vmatmul.f32.gmra.mxu0 %v573
        %v689 = vpop.f32.mrf.mxu0
        %v690 = vadd.f32 %v462, %v689
        %691 = vmatmul.f32.gmra.mxu0 %v576
        %v692 = vpop.f32.mrf.mxu0
        %v693 = vadd.f32 %v467, %v692
        %694 = vmatmul.f32.gmra.mxu0 %v579
        %v695 = vpop.f32.mrf.mxu0
        %v696 = vadd.f32 %v472, %v695
        %697 = vmatmul.f32.gmra.mxu0 %v582
        %v698 = vpop.f32.mrf.mxu0
        %v699 = vadd.f32 %v477, %v698
        %700 = vmatmul.f32.gmra.mxu0 %v585
        %v701 = vpop.f32.mrf.mxu0
        %v702 = vadd.f32 %v482, %v701
        %703 = vmatmul.f32.gmra.mxu0 %v588
        %v704 = vpop.f32.mrf.mxu0
        %v705 = vadd.f32 %v487, %v704
        %706 = vmatmul.f32.gmra.mxu0 %v591
        %v707 = vpop.f32.mrf.mxu0
        %v708 = vadd.f32 %v492, %v707
        %709 = vmatmul.f32.gmra.mxu0 %v594
        %v710 = vpop.f32.mrf.mxu0
        %v711 = vadd.f32 %v497, %v710
        %712 = vdwg.mxu0
        %v713 = vmax.f32 %v618, 0.0
        %v714 = vmax.f32 %v621, 0.0
        %v715 = vmax.f32 %v624, 0.0
        %v716 = vmax.f32 %v627, 0.0
        %v717 = vmax.f32 %v630, 0.0
        %v718 = vmax.f32 %v633, 0.0
        %v719 = vmax.f32 %v636, 0.0
        %v720 = vmax.f32 %v639, 0.0
        %v721 = vmax.f32 %v642, 0.0
        %v722 = vmax.f32 %v645, 0.0
        %v723 = vmax.f32 %v648, 0.0
        %v724 = vmax.f32 %v651, 0.0
        %v725 = vmax.f32 %v654, 0.0
        %v726 = vmax.f32 %v657, 0.0
        %v727 = vmax.f32 %v660, 0.0
        %v728 = vmax.f32 %v663, 0.0
        %v729 = vmax.f32 %v666, 0.0
        %v730 = vmax.f32 %v669, 0.0
        %v731 = vmax.f32 %v672, 0.0
        %v732 = vmax.f32 %v675, 0.0
        %v733 = vmax.f32 %v678, 0.0
        %v734 = vmax.f32 %v681, 0.0
        %v735 = vmax.f32 %v684, 0.0
        %v736 = vmax.f32 %v687, 0.0
        %v737 = vmax.f32 %v690, 0.0
        %v738 = vmax.f32 %v693, 0.0
        %v739 = vmax.f32 %v696, 0.0
        %v740 = vmax.f32 %v699, 0.0
        %v741 = vmax.f32 %v702, 0.0
        %v742 = vmax.f32 %v705, 0.0
        %v743 = vmax.f32 %v708, 0.0
        %v744 = vmax.f32 %v711, 0.0
        %v745 = vld [vmem:[%s3] sm:$0xff]
        %v746 = vld [vmem:[%s3 + $0x8] sm:$0xff]
        %v747 = vld [vmem:[%s4] sm:$0xff]
        %749 = vset.pattern.permute.xlu0 0
        %750 = vperm.xlu0 %749, %v747
        %v751 = vpop.permute.xlu0 %750
        %753 = vmatpush.msra.mxu0 %v728
        %754 = vmatpush.msra.mxu0 %v727
        %755 = vmatpush.msra.mxu0 %v726
        %756 = vmatpush.msra.mxu0 %v725
        %757 = vmatpush.msra.mxu0 %v724
        %758 = vmatpush.msra.mxu0 %v723
        %759 = vmatpush.msra.mxu0 %v722
        %760 = vmatpush.msra.mxu0 %v721
        %761 = vmatpush.msra.mxu0 %v720
        %762 = vmatpush.msra.mxu0 %v719
        %763 = vmatpush.msra.mxu0 %v718
        %764 = vmatpush.msra.mxu0 %v717
        %765 = vmatpush.msra.mxu0 %v716
        %766 = vmatpush.msra.mxu0 %v715
        %767 = vmatpush.msra.mxu0 %v714
        %768 = vmatpush.msra.mxu0 %v713
        %769 = vmatmul.f32.gmra.mxu0 %v745
        %v770 = vpop.f32.mrf.mxu0
        %v771 = vadd.f32 %v751, %v770
        %772 = vdwg.mxu0
        %773 = vmatpush.msra.mxu0 %v744
        %774 = vmatpush.msra.mxu0 %v743
        %775 = vmatpush.msra.mxu0 %v742
        %776 = vmatpush.msra.mxu0 %v741
        %777 = vmatpush.msra.mxu0 %v740
        %778 = vmatpush.msra.mxu0 %v739
        %779 = vmatpush.msra.mxu0 %v738
        %780 = vmatpush.msra.mxu0 %v737
        %781 = vmatpush.msra.mxu0 %v736
        %782 = vmatpush.msra.mxu0 %v735
        %783 = vmatpush.msra.mxu0 %v734
        %784 = vmatpush.msra.mxu0 %v733
        %785 = vmatpush.msra.mxu0 %v732
        %786 = vmatpush.msra.mxu0 %v731
        %787 = vmatpush.msra.mxu0 %v730
        %788 = vmatpush.msra.mxu0 %v729
        %789 = vmatmul.f32.gmra.mxu0 %v746
        %v790 = vpop.f32.mrf.mxu0
        %v791 = vadd.f32 %v771, %v790
        %792 = vdwg.mxu0
        %v793 = vmul.f32 %v791, 0.5
        %v794 = vtanh.pop %v793
        %v795 = vmul.f32 %v794, 0.5
        %v796 = vadd.f32 %v795, 0.5
        %v797 = vld [vmem:[%s5] sm:$0xff]
        %799 = vset.pattern.permute.xlu0 0
        %800 = vperm.xlu0 %799, %v797
        %v801 = vpop.permute.xlu0 %800
        %v803 = vmul.f32 %v796, %v801
        %v804 = vld [vmem:[%s6] sm:$0xff]
        %806 = vset.pattern.permute.xlu0 0
        %807 = vperm.xlu0 %806, %v804
        %v808 = vpop.permute.xlu0 %807
        %v810 = vmul.f32 %v791, %v808
        %v811 = vadd.f32 %v803, %v810
        %812 = vst [vmem:[%s269] sm:$0xff] %v811
        %s813 = sand.u32 %s181, 1
        %s814 = scalar_lea.sflag [#allocation3], %s813
        %s815 = sand.u32 %s181, 1
        %s816 = smul.addr %s815, 8
        %s817 = scalar_lea.vmem [#allocation2], %s816
        // Predicated region
        $region49: #{tpu_custom_call.1} parent=47 // pred_check
          %p818 = pneg %p191
        $region50: #{tpu_custom_call.1} parent=47 // pred_check_branch
          %820 = sbr.rel (%p818) target = $region52
        $region51: #{tpu_custom_call.1} parent=47 // pred_region
          %822 = vsyncadd %s814, 0
          %s823 = smul.addr %s21, 8
          %s824 = scalar_lea.hbm %s7, %s823
          %s826 = sshll.u32 %s817, 4
          %s827 = int_to_ptr.vmem [resolvable:$true] %s826
          %s828 = sshll.u32 %s824, 4
          %s829 = int_to_ptr.hbm [resolvable:$true] %s828
          %831 = dma.vmem_to_hbm [thread:$0]  %s827, 128, %s829, %s814
        $region52: #{tpu_custom_call.1} parent=47 // pred_fallthru
          _
      $region48: #{tpu_custom_call.1} parent=5 // pred_fallthru
        _
      %p832 = scmp.le.s32.totalorder 2, %s16
      // Predicated region
      $region53: #{tpu_custom_call.1} parent=5 // pred_check
        %p833 = pneg %p832
      $region54: #{tpu_custom_call.1} parent=5 // pred_check_branch
        %835 = sbr.rel (%p833) target = $region56
      $region55: #{tpu_custom_call.1} parent=5 // pred_region
        %s836 = ssub.s32 %s16, 2
        // Predicated region
        $region57: #{tpu_custom_call.1} parent=55 // pred_check
          %p837 = pneg %p197
        $region58: #{tpu_custom_call.1} parent=55 // pred_check_branch
          %839 = sbr.rel (%p837) target = $region60
        $region59: #{tpu_custom_call.1} parent=55 // pred_region
          %s840 = sand.u32 %s182, 1
          %s841 = scalar_lea.sflag [#allocation3], %s840
          %s842 = sand.u32 %s182, 1
          %s843 = smul.addr %s842, 8
          %s844 = scalar_lea.vmem [#allocation2], %s843
          %846 = dma.done %s841, 128
        $region60: #{tpu_custom_call.1} parent=55 // pred_fallthru
          _
      $region56: #{tpu_custom_call.1} parent=5 // pred_fallthru
        _
    $region6: #{tpu_custom_call.1} parent=1 // loop_footer
      %s20 = sadd.s32 1, %s16
    $region7: #{tpu_custom_call.1} parent=1 // loop_footer_branch
      %15 = sbr.rel target = $region3
    $region8: #{tpu_custom_call.1} parent=1 // loop_exit
      _
    %847 = vsyncpa [#allocation3], 1
    %s848 = scalar_lea.sflag [#allocation3], 1
    %849 = vsyncpa %s848, 1

</llo_original>
